<compile_context>
chip_gen: v7x
topology: tpu7x:2x2x1
jax: 0.10.0
libtpu: 0.0.40
codegen_flags: <defaults>
</compile_context>

<pallas_src>
import functools

import jax
import jax.numpy as jnp
from jax.experimental import pallas as pl
from jax.experimental.pallas import tpu as pltpu

# len(use_col_list) == 100 -> input features = 99 ('earning_diff' is the target)
IN_FEATURES = 99
H1 = 128
H2 = 32
OUT = 1

NEG_SLOPE = 0.01  # F.leaky_relu default


def _leaky_relu(x):
    return jnp.where(x > 0, x, NEG_SLOPE * x)


def _mlp_kernel(x_ref, w1_ref, b1_ref, w2_ref, b2_ref, w3_ref, b3_ref, o_ref):
    # fc1 + leaky_relu (dropout is identity in eval mode).
    # bf16 matmul operands -> MXU fast path; accumulate + epilogue in f32.
    xb = x_ref[...].astype(jnp.bfloat16)
    h = jnp.dot(xb, w1_ref[...], preferred_element_type=jnp.float32)
    h = _leaky_relu(h + b1_ref[...])
    # fc2 + leaky_relu
    h = jnp.dot(h.astype(jnp.bfloat16), w2_ref[...],
                preferred_element_type=jnp.float32)
    h = _leaky_relu(h + b2_ref[...])
    # fc3 (linear head)
    o = jnp.dot(h.astype(jnp.bfloat16), w3_ref[...],
                preferred_element_type=jnp.float32)
    o_ref[...] = (o + b3_ref[...]).astype(o_ref.dtype)
    # TODO(synk): training-mode stochastic dropout (pltpu.prng_*) not implemented;
    # forward here matches net.eval() inference semantics.


def _round_up(n, m):
    return ((n + m - 1) // m) * m


def _effective_block(batch, block_b):
    # Keep >= 2 grid steps when the batch allows it (v7x has 2 TensorCores),
    # 128-row aligned for the MXU, and never (much) larger than the batch.
    bb = min(block_b, _round_up(pl.cdiv(batch, 2), 128))
    bb = min(bb, _round_up(batch, 8))
    return max(bb, 8)


@functools.partial(jax.jit, static_argnames=("block_b",))
def regression_network_forward(x, params, *, block_b=512):
    """x: [B, IN_FEATURES] float32 -> [B, 1] float32."""
    w1, b1, w2, b2, w3, b3 = params
    B, F = x.shape
    assert F == IN_FEATURES

    bb = _effective_block(B, block_b)
    grid = (pl.cdiv(B, bb),)  # ragged last tile handled by Pallas (no jnp.pad)

    # Constant index_map -> block never changes -> weights stay resident in VMEM.
    full = lambda shape: pl.BlockSpec(shape, lambda i: (0,) * len(shape))

    flops = 2 * B * (IN_FEATURES * H1 + H1 * H2 + H2 * OUT)
    weight_bytes = (w1.size * w1.dtype.itemsize + w2.size * w2.dtype.itemsize
                    + w3.size * w3.dtype.itemsize
                    + b1.size * 4 + b2.size * 4 + b3.size * 4)
    bytes_accessed = B * IN_FEATURES * x.dtype.itemsize + B * OUT * 4 + weight_bytes

    out = pl.pallas_call(
        _mlp_kernel,
        out_shape=jax.ShapeDtypeStruct((B, OUT), jnp.float32),
        grid_spec=pltpu.PrefetchScalarGridSpec(
            num_scalar_prefetch=0,
            grid=grid,
            in_specs=[
                pl.BlockSpec((bb, IN_FEATURES), lambda i: (i, 0)),  # x tile
                full((IN_FEATURES, H1)),  # w1 (bf16)
                full((1, H1)),            # b1 (f32)
                full((H1, H2)),           # w2 (bf16)
                full((1, H2)),            # b2 (f32)
                full((H2, OUT)),          # w3 (bf16)
                full((1, OUT)),           # b3 (f32)
            ],
            out_specs=pl.BlockSpec((bb, OUT), lambda i: (i, 0)),
        ),
        compiler_params=pltpu.CompilerParams(
            dimension_semantics=("parallel",),
        ),
        cost_estimate=pl.CostEstimate(
            flops=flops, transcendentals=0, bytes_accessed=bytes_accessed),
    )(x, w1, b1, w2, b2, w3, b3)

    return out


def init_params(key):
    """PyTorch-Linear-style init (uniform +-1/sqrt(fan_in)); weights stored bf16."""
    def linear(key, fan_in, fan_out):
        kw, kb = jax.random.split(key)
        bound = 1.0 / jnp.sqrt(float(fan_in))
        w = jax.random.uniform(kw, (fan_in, fan_out), jnp.float32, -bound, bound)
        b = jax.random.uniform(kb, (1, fan_out), jnp.float32, -bound, bound)
        return w.astype(jnp.bfloat16), b  # bf16 matmul operands, f32 bias/epilogue

    k1, k2, k3 = jax.random.split(key, 3)
    w1, b1 = linear(k1, IN_FEATURES, H1)
    w2, b2 = linear(k2, H1, H2)
    w3, b3 = linear(k3, H2, OUT)
    return (w1, b1, w2, b2, w3, b3)


def _reference_forward_bf16(x, params):
    """Matches the kernel numerics: bf16 operands, f32 accumulation/epilogue."""
    w1, b1, w2, b2, w3, b3 = params
    h = jnp.dot(x.astype(jnp.bfloat16), w1, preferred_element_type=jnp.float32)
    h = _leaky_relu(h + b1)
    h = jnp.dot(h.astype(jnp.bfloat16), w2, preferred_element_type=jnp.float32)
    h = _leaky_relu(h + b2)
    o = jnp.dot(h.astype(jnp.bfloat16), w3, preferred_element_type=jnp.float32)
    return o + b3


def _reference_forward_f32(x, params):
    w1, b1, w2, b2, w3, b3 = params
    h = _leaky_relu(x @ w1.astype(jnp.float32) + b1)
    h = _leaky_relu(h @ w2.astype(jnp.float32) + b2)
    return h @ w3.astype(jnp.float32) + b3


if __name__ == "__main__":
    key = jax.random.PRNGKey(0)
    kp, kx1, kx2 = jax.random.split(key, 3)

    params = init_params(kp)

    # Case 1: batch = 128 (the DataLoader batch size in the original spec).
    B1 = 128
    x1 = jax.random.normal(kx1, (B1, IN_FEATURES), dtype=jnp.float32)
    out1 = jax.block_until_ready(regression_network_forward(x1, params))
    ref1 = _reference_forward_bf16(x1, params)
    assert out1.shape == (B1, 1), out1.shape
    assert jnp.allclose(out1, ref1, atol=2e-3, rtol=2e-3), (
        float(jnp.max(jnp.abs(out1 - ref1))))
    # sanity vs. full-f32 math (bf16 operands -> loose tolerance)
    ref1_f32 = _reference_forward_f32(x1, params)
    assert jnp.allclose(out1, ref1_f32, atol=6e-2, rtol=6e-2), (
        float(jnp.max(jnp.abs(out1 - ref1_f32))))

    # Case 2: ragged batch (not a multiple of the tile) to verify masked
    # out-of-bounds handling of the last tile (no wrapper-side padding).
    B2 = 200
    x2 = jax.random.normal(kx2, (B2, IN_FEATURES), dtype=jnp.float32)
    out2 = jax.block_until_ready(regression_network_forward(x2, params))
    ref2 = _reference_forward_bf16(x2, params)
    assert out2.shape == (B2, 1), out2.shape
    assert jnp.allclose(out2, ref2, atol=2e-3, rtol=2e-3), (
        float(jnp.max(jnp.abs(out2 - ref2))))

    print("KERNEL_OK")
</pallas_src>

<mosaic_0001>
module attributes {stable_mosaic.version = 11 : i64} {
  func.func @_mlp_kernel(%arg0: i32, %arg1: memref<128x99xf32, #tpu.memory_space<vmem>>, %arg2: memref<99x128xbf16, #tpu.memory_space<vmem>>, %arg3: memref<1x128xf32, #tpu.memory_space<vmem>>, %arg4: memref<128x32xbf16, #tpu.memory_space<vmem>>, %arg5: memref<1x32xf32, #tpu.memory_space<vmem>>, %arg6: memref<32x1xbf16, #tpu.memory_space<vmem>>, %arg7: memref<1x1xf32, #tpu.memory_space<vmem>>, %arg8: memref<128x1xf32, #tpu.memory_space<vmem>>) attributes {dimension_semantics = [#tpu.dimension_semantics<parallel>], iteration_bounds = array<i64: 1>, scalar_prefetch = 0 : i64, scratch_operands = 0 : i64, tpu.core_type = #tpu.core_type<tc>, window_params = [{transform_indices = @transform_0, window_bounds = array<i64: 128, 99>}, {pipeline_mode = #tpu.pipeline_mode<synchronous>, transform_indices = @transform_1, window_bounds = array<i64: 99, 128>}, {pipeline_mode = #tpu.pipeline_mode<synchronous>, transform_indices = @transform_2, window_bounds = array<i64: 1, 128>}, {pipeline_mode = #tpu.pipeline_mode<synchronous>, transform_indices = @transform_3, window_bounds = array<i64: 128, 32>}, {pipeline_mode = #tpu.pipeline_mode<synchronous>, transform_indices = @transform_4, window_bounds = array<i64: 1, 32>}, {pipeline_mode = #tpu.pipeline_mode<synchronous>, transform_indices = @transform_5, window_bounds = array<i64: 32, 1>}, {pipeline_mode = #tpu.pipeline_mode<synchronous>, transform_indices = @transform_6, window_bounds = array<i64: 1, 1>}, {transform_indices = @transform_7, window_bounds = array<i64: 128, 1>}]} {
    %c0 = arith.constant 0 : index
    %c0_0 = arith.constant 0 : index
    %0 = vector.load %arg1[%c0, %c0_0] : memref<128x99xf32, #tpu.memory_space<vmem>>, vector<128x99xf32>
    %1 = arith.truncf %0 : vector<128x99xf32> to vector<128x99xbf16>
    %c0_1 = arith.constant 0 : index
    %c0_2 = arith.constant 0 : index
    %2 = vector.load %arg2[%c0_1, %c0_2] : memref<99x128xbf16, #tpu.memory_space<vmem>>, vector<99x128xbf16>
    %cst = arith.constant dense<0.000000e+00> : vector<128x128xf32>
    %3 = tpu.matmul %1, %2, %cst {dimension_numbers = #tpu.dot_dimension_numbers<[1], [0], [0], [1], [0, 0, 1, 1], [], []>} : vector<128x99xbf16>, vector<99x128xbf16>, vector<128x128xf32> -> vector<128x128xf32>
    %c0_3 = arith.constant 0 : index
    %c0_4 = arith.constant 0 : index
    %4 = vector.load %arg3[%c0_3, %c0_4] : memref<1x128xf32, #tpu.memory_space<vmem>>, vector<1x128xf32>
    %5 = vector.broadcast %4 : vector<1x128xf32> to vector<128x128xf32>
    %6 = arith.addf %3, %5 : vector<128x128xf32>
    %cst_5 = arith.constant 0.000000e+00 : f32
    %7 = vector.broadcast %cst_5 : f32 to vector<128x128xf32>
    %8 = arith.cmpf ogt, %6, %7 : vector<128x128xf32>
    %cst_6 = arith.constant 0.00999999977 : f32
    %9 = vector.broadcast %cst_6 : f32 to vector<128x128xf32>
    %10 = arith.mulf %9, %6 : vector<128x128xf32>
    %11 = arith.select %8, %6, %10 : vector<128x128xi1>, vector<128x128xf32>
    %12 = arith.truncf %11 : vector<128x128xf32> to vector<128x128xbf16>
    %c0_7 = arith.constant 0 : index
    %c0_8 = arith.constant 0 : index
    %13 = vector.load %arg4[%c0_7, %c0_8] : memref<128x32xbf16, #tpu.memory_space<vmem>>, vector<128x32xbf16>
    %cst_9 = arith.constant dense<0.000000e+00> : vector<128x32xf32>
    %14 = tpu.matmul %12, %13, %cst_9 {dimension_numbers = #tpu.dot_dimension_numbers<[1], [0], [0], [1], [0, 0, 1, 1], [], []>} : vector<128x128xbf16>, vector<128x32xbf16>, vector<128x32xf32> -> vector<128x32xf32>
    %c0_10 = arith.constant 0 : index
    %c0_11 = arith.constant 0 : index
    %15 = vector.load %arg5[%c0_10, %c0_11] : memref<1x32xf32, #tpu.memory_space<vmem>>, vector<1x32xf32>
    %16 = vector.broadcast %15 : vector<1x32xf32> to vector<128x32xf32>
    %17 = arith.addf %14, %16 : vector<128x32xf32>
    %cst_12 = arith.constant 0.000000e+00 : f32
    %18 = vector.broadcast %cst_12 : f32 to vector<128x32xf32>
    %19 = arith.cmpf ogt, %17, %18 : vector<128x32xf32>
    %cst_13 = arith.constant 0.00999999977 : f32
    %20 = vector.broadcast %cst_13 : f32 to vector<128x32xf32>
    %21 = arith.mulf %20, %17 : vector<128x32xf32>
    %22 = arith.select %19, %17, %21 : vector<128x32xi1>, vector<128x32xf32>
    %23 = arith.truncf %22 : vector<128x32xf32> to vector<128x32xbf16>
    %c0_14 = arith.constant 0 : index
    %c0_15 = arith.constant 0 : index
    %24 = vector.load %arg6[%c0_14, %c0_15] : memref<32x1xbf16, #tpu.memory_space<vmem>>, vector<32x1xbf16>
    %cst_16 = arith.constant dense<0.000000e+00> : vector<128x1xf32>
    %25 = tpu.matmul %23, %24, %cst_16 {dimension_numbers = #tpu.dot_dimension_numbers<[1], [0], [0], [1], [0, 0, 1, 1], [], []>} : vector<128x32xbf16>, vector<32x1xbf16>, vector<128x1xf32> -> vector<128x1xf32>
    %c0_17 = arith.constant 0 : index
    %c0_18 = arith.constant 0 : index
    %26 = vector.load %arg7[%c0_17, %c0_18] : memref<1x1xf32, #tpu.memory_space<vmem>>, vector<1x1xf32>
    %27 = vector.broadcast %26 : vector<1x1xf32> to vector<128x1xf32>
    %28 = arith.addf %25, %27 : vector<128x1xf32>
    %c0_19 = arith.constant 0 : index
    %c0_20 = arith.constant 0 : index
    %29 = vector.load %arg8[%c0_19, %c0_20] : memref<128x1xf32, #tpu.memory_space<vmem>>, vector<128x1xf32>
    tpu.vector_store %arg8[%c0_19, %c0_20], %28 {strides = array<i32>} : memref<128x1xf32, #tpu.memory_space<vmem>>, vector<128x1xf32>,
    return
  }
  func.func @transform_0(%arg0: i32) -> (i32, i32) {
    %c0_i32 = arith.constant 0 : i32
    %c0_i32_0 = arith.constant 0 : i32
    return %arg0, %c0_i32 : i32, i32
  }
  func.func @transform_1(%arg0: i32) -> (i32, i32) {
    %c0_i32 = arith.constant 0 : i32
    %c0_i32_0 = arith.constant 0 : i32
    %c0_i32_1 = arith.constant 0 : i32
    return %c0_i32, %c0_i32_0 : i32, i32
  }
  func.func @transform_2(%arg0: i32) -> (i32, i32) {
    %c0_i32 = arith.constant 0 : i32
    %c0_i32_0 = arith.constant 0 : i32
    %c0_i32_1 = arith.constant 0 : i32
    return %c0_i32, %c0_i32_0 : i32, i32
  }
  func.func @transform_3(%arg0: i32) -> (i32, i32) {
    %c0_i32 = arith.constant 0 : i32
    %c0_i32_0 = arith.constant 0 : i32
    %c0_i32_1 = arith.constant 0 : i32
    return %c0_i32, %c0_i32_0 : i32, i32
  }
  func.func @transform_4(%arg0: i32) -> (i32, i32) {
    %c0_i32 = arith.constant 0 : i32
    %c0_i32_0 = arith.constant 0 : i32
    %c0_i32_1 = arith.constant 0 : i32
    return %c0_i32, %c0_i32_0 : i32, i32
  }
  func.func @transform_5(%arg0: i32) -> (i32, i32) {
    %c0_i32 = arith.constant 0 : i32
    %c0_i32_0 = arith.constant 0 : i32
    %c0_i32_1 = arith.constant 0 : i32
    return %c0_i32, %c0_i32_0 : i32, i32
  }
  func.func @transform_6(%arg0: i32) -> (i32, i32) {
    %c0_i32 = arith.constant 0 : i32
    %c0_i32_0 = arith.constant 0 : i32
    %c0_i32_1 = arith.constant 0 : i32
    return %c0_i32, %c0_i32_0 : i32, i32
  }
  func.func @transform_7(%arg0: i32) -> (i32, i32) {
    %c0_i32 = arith.constant 0 : i32
    %c0_i32_0 = arith.constant 0 : i32
    return %arg0, %c0_i32 : i32, i32
  }
}

</mosaic_0001>

<llo_original>
// kernel: regression_network_forward.1
$region0: #{regression_network_forward.1}
  #allocation0 [shape = 'u32[]', space=smem, size = 0x4, offset = 0x4, fixed_abs, tag = 'smem constant byte address 0x4 - core index']
  #allocation1 [shape = 'u32[144,128]{1,0:T(1,128)}', space=vmem, size = 0x12000, scoped, tag = 'internal scratch']
  #allocation2 [shape = 'f32[1,1]{1,0:T(1,128)S(1)}', space=vmem, size = 0x200, scoped, tag = 'scoped memory for regression_network_forward.1']
  %s0 = inlined_call_operand.vmem [shape: f32[128,99], index: 0, kind: input, shape index: {}]
  %s1 = inlined_call_operand.vmem [shape: bf16[99,128], index: 1, kind: input, shape index: {}]
  %s2 = inlined_call_operand.vmem [shape: f32[1,128], index: 2, kind: input, shape index: {}]
  %s3 = inlined_call_operand.vmem [shape: bf16[128,32], index: 3, kind: input, shape index: {}]
  %s4 = inlined_call_operand.vmem [shape: f32[1,32], index: 4, kind: input, shape index: {}]
  %s5 = inlined_call_operand.vmem [shape: bf16[32,1], index: 5, kind: input, shape index: {}]
  %s6 = inlined_call_operand.<no memory space> [shape: f32[1,1], index: 6, kind: input, shape index: {}]
  %s7 = inlined_call_operand.vmem [shape: f32[128,1], index: 7, kind: output, shape index: {}]
  %s8 = sld [smem:[#allocation0]]
  $region38: #{regression_network_forward.1} parent=0
    _
  %s10 = ssub.s32 1, %s8
  %s11 = scalar_select 0, %s10, %s8
  %v12 = vstv %s6
  %13 = vst [vmem:[#allocation2] sm:$0x1] %v12
  // Predicated region
  $region2: #{regression_network_forward.1} parent=0 // pred_check
    _
  $region3: #{regression_network_forward.1} parent=0 // pred_check_branch
    %15 = sbr.rel (0) target = $region5
  $region4: #{regression_network_forward.1} parent=0 // pred_region
    _
  $region5: #{regression_network_forward.1} parent=0 // pred_fallthru
    _
  // Predicated region
  $region6: #{regression_network_forward.1} parent=0 // pred_check
    _
  $region7: #{regression_network_forward.1} parent=0 // pred_check_branch
    %17 = sbr.rel (0) target = $region9
  $region8: #{regression_network_forward.1} parent=0 // pred_region
    _
  $region9: #{regression_network_forward.1} parent=0 // pred_fallthru
    _
  // Predicated region
  $region10: #{regression_network_forward.1} parent=0 // pred_check
    _
  $region11: #{regression_network_forward.1} parent=0 // pred_check_branch
    %19 = sbr.rel (0) target = $region13
  $region12: #{regression_network_forward.1} parent=0 // pred_region
    _
  $region13: #{regression_network_forward.1} parent=0 // pred_fallthru
    _
  // Predicated region
  $region14: #{regression_network_forward.1} parent=0 // pred_check
    _
  $region15: #{regression_network_forward.1} parent=0 // pred_check_branch
    %21 = sbr.rel (0) target = $region17
  $region16: #{regression_network_forward.1} parent=0 // pred_region
    _
  $region17: #{regression_network_forward.1} parent=0 // pred_fallthru
    _
  // Predicated region
  $region18: #{regression_network_forward.1} parent=0 // pred_check
    _
  $region19: #{regression_network_forward.1} parent=0 // pred_check_branch
    %23 = sbr.rel (0) target = $region21
  $region20: #{regression_network_forward.1} parent=0 // pred_region
    _
  $region21: #{regression_network_forward.1} parent=0 // pred_fallthru
    _
  // Predicated region
  $region22: #{regression_network_forward.1} parent=0 // pred_check
    _
  $region23: #{regression_network_forward.1} parent=0 // pred_check_branch
    %25 = sbr.rel (0) target = $region25
  $region24: #{regression_network_forward.1} parent=0 // pred_region
    _
  $region25: #{regression_network_forward.1} parent=0 // pred_fallthru
    _
  // Predicated region
  $region26: #{regression_network_forward.1} parent=0 // pred_check
    _
  $region27: #{regression_network_forward.1} parent=0 // pred_check_branch
    %27 = sbr.rel (0) target = $region29
  $region28: #{regression_network_forward.1} parent=0 // pred_region
    _
  $region29: #{regression_network_forward.1} parent=0 // pred_fallthru
    _
  %v29 = vld [vmem:[%s0] sm:$0xff]
  %v30 = vld [vmem:[%s0 + $0x8] sm:$0xff]
  %v31 = vld [vmem:[%s0 + $0x10] sm:$0xff]
  %v32 = vld [vmem:[%s0 + $0x18] sm:$0xff]
  %v33 = vld [vmem:[%s0 + $0x20] sm:$0xff]
  %v34 = vld [vmem:[%s0 + $0x28] sm:$0xff]
  %v35 = vld [vmem:[%s0 + $0x30] sm:$0xff]
  %v36 = vld [vmem:[%s0 + $0x38] sm:$0xff]
  %v37 = vld [vmem:[%s0 + $0x40] sm:$0xff]
  %v38 = vld [vmem:[%s0 + $0x48] sm:$0xff]
  %v39 = vld [vmem:[%s0 + $0x50] sm:$0xff]
  %v40 = vld [vmem:[%s0 + $0x58] sm:$0xff]
  %v41 = vld [vmem:[%s0 + $0x60] sm:$0xff]
  %v42 = vld [vmem:[%s0 + $0x68] sm:$0xff]
  %v43 = vld [vmem:[%s0 + $0x70] sm:$0xff]
  %v44 = vld [vmem:[%s0 + $0x78] sm:$0xff]
  %v45 = vpack.c.bf16 %v30, %v29
  %v46 = vpack.c.bf16 %v32, %v31
  %v47 = vpack.c.bf16 %v34, %v33
  %v48 = vpack.c.bf16 %v36, %v35
  %v49 = vpack.c.bf16 %v38, %v37
  %v50 = vpack.c.bf16 %v40, %v39
  %v51 = vpack.c.bf16 %v42, %v41
  %v52 = vpack.c.bf16 %v44, %v43
  %v53 = vld [vmem:[%s1] sm:$0xf]
  %v54 = vld [vmem:[%s1 + $0x4] sm:$0xf]
  %v55 = vld [vmem:[%s1 + $0x8] sm:$0xf]
  %v56 = vld [vmem:[%s1 + $0xc] sm:$0xf]
  %v57 = vld [vmem:[%s1 + $0x10] sm:$0xf]
  %v58 = vld [vmem:[%s1 + $0x14] sm:$0xf]
  %v59 = vld [vmem:[%s1 + $0x18] sm:$0xf]
  %v60 = vld [vmem:[%s1 + $0x1c] sm:$0xf]
  %v61 = vld [vmem:[%s1 + $0x20] sm:$0xf]
  %v62 = vld [vmem:[%s1 + $0x24] sm:$0xf]
  %v63 = vld [vmem:[%s1 + $0x28] sm:$0xf]
  %v64 = vld [vmem:[%s1 + $0x2c] sm:$0xf]
  %v65 = vld [vmem:[%s1 + $0x30] sm:$0x3]
  %v66 = vld [vmem:[%s2] sm:$0x1]
  %v68 = vlaneseq
  %v69 = vshrl.u32 %v68, 7
  %v70 = vsub.s32 0, %v69
  %v71 = vrot.slane %v66, %v70
  %v86 = vunpack.c.l.b16 %v53
  %v87 = vunpack.c.l.b16 %v54
  %v88 = vunpack.c.l.b16 %v55
  %v89 = vunpack.c.l.b16 %v56
  %v90 = vunpack.c.l.b16 %v57
  %v91 = vunpack.c.l.b16 %v58
  %v92 = vunpack.c.l.b16 %v59
  %v93 = vunpack.c.l.b16 %v60
  %v94 = vunpack.c.l.b16 %v61
  %v95 = vunpack.c.l.b16 %v62
  %v96 = vunpack.c.l.b16 %v63
  %v97 = vunpack.c.l.b16 %v64
  %v98 = vunpack.c.l.b16 %v65
  %v99 = vpack.c.b16 %v87, %v86
  %v100 = vpack.c.b16 %v89, %v88
  %v101 = vpack.c.b16 %v91, %v90
  %v102 = vpack.c.b16 %v93, %v92
  %v103 = vpack.c.b16 %v95, %v94
  %v104 = vpack.c.b16 %v97, %v96
  %v105 = vpack.c.b16 %v98, %v98
  %vm112 = vcmask 809984
  %v114 = vsel %vm112, %v45, 0
  %v117 = vsel %vm112, %v46, 0
  %v120 = vsel %vm112, %v47, 0
  %v123 = vsel %vm112, %v48, 0
  %v126 = vsel %vm112, %v49, 0
  %v129 = vsel %vm112, %v50, 0
  %v132 = vsel %vm112, %v51, 0
  %v135 = vsel %vm112, %v52, 0
  %vm137 = vcmask 1040384
  %vm138 = vcmask 1041408
  %v139 = vsel %vm137, 4294967295, 65535
  %v140 = vsel %vm138, %v139, 0
  %v142 = vand.u32 %v105, %v140
  %144 = vmatprep.subr.bf16.mxu0 0
  %145 = vmatpush1.bf16.msra.mxu0 %v99
  %146 = vmatprep.subr.bf16.mxu0 0
  %147 = vmatpush1.bf16.msra.mxu0 %v100
  %148 = vmatprep.subr.bf16.mxu0 0
  %149 = vmatpush1.bf16.msra.mxu0 %v101
  %150 = vmatprep.subr.bf16.mxu0 0
  %151 = vmatpush1.bf16.msra.mxu0 %v102
  %152 = vmatprep.subr.bf16.mxu0 0
  %153 = vmatpush1.bf16.msra.mxu0 %v103
  %154 = vmatprep.subr.bf16.mxu0 0
  %155 = vmatpush1.bf16.msra.mxu0 %v104
  %156 = vmatprep.subr.bf16.mxu0 0
  %157 = vmatpush1.bf16.msra.mxu0 %v142
  %158 = vmatprep.subr.bf16.mxu0 0
  %159 = vmatpush1.bf16.msra.mxu0 0
  %160 = vmatprep.subr.bf16.mxu0 0
  %161 = vmatpush1.bf16.msra.mxu0 0
  %162 = vmatprep.subr.bf16.mxu0 0
  %163 = vmatpush1.bf16.msra.mxu0 0
  %164 = vmatprep.subr.bf16.mxu0 0
  %165 = vmatpush1.bf16.msra.mxu0 0
  %166 = vmatprep.subr.bf16.mxu0 0
  %167 = vmatpush1.bf16.msra.mxu0 0
  %168 = vmatprep.subr.bf16.mxu0 0
  %169 = vmatpush1.bf16.msra.mxu0 0
  %170 = vmatprep.subr.bf16.mxu0 0
  %171 = vmatpush1.bf16.msra.mxu0 0
  %172 = vmatprep.subr.bf16.mxu0 0
  %173 = vmatpush1.bf16.msra.mxu0 0
  %174 = vmatprep.subr.bf16.mxu0 0
  %175 = vmatpush1.bf16.msra.mxu0 0
  %176 = vmatprep.mubr.bf16.mxu0 0
  %177 = vmatmul.mubr.bf16.gmra.mrb[0].mxu0 %v114
  %v178 = vpop.f32.mrb[0].mxu0
  %v179 = vadd.f32 %v71, %v178
  %v180 = vpop.f32.mrb[0].mxu0
  %v181 = vpop.f32.mrb[0].mxu0
  %v182 = vadd.f32 %v71, %v181
  %v183 = vpop.f32.mrb[0].mxu0
  %184 = vmatprep.mubr.bf16.mxu0 0
  %185 = vmatmul.mubr.bf16.gmra.mrb[0].mxu0 %v117
  %v186 = vpop.f32.mrb[0].mxu0
  %v187 = vadd.f32 %v71, %v186
  %v188 = vpop.f32.mrb[0].mxu0
  %v189 = vpop.f32.mrb[0].mxu0
  %v190 = vadd.f32 %v71, %v189
  %v191 = vpop.f32.mrb[0].mxu0
  %192 = vmatprep.mubr.bf16.mxu0 0
  %193 = vmatmul.mubr.bf16.gmra.mrb[0].mxu0 %v120
  %v194 = vpop.f32.mrb[0].mxu0
  %v195 = vadd.f32 %v71, %v194
  %v196 = vpop.f32.mrb[0].mxu0
  %v197 = vpop.f32.mrb[0].mxu0
  %v198 = vadd.f32 %v71, %v197
  %v199 = vpop.f32.mrb[0].mxu0
  %200 = vmatprep.mubr.bf16.mxu0 0
  %201 = vmatmul.mubr.bf16.gmra.mrb[0].mxu0 %v123
  %v202 = vpop.f32.mrb[0].mxu0
  %v203 = vadd.f32 %v71, %v202
  %v204 = vpop.f32.mrb[0].mxu0
  %v205 = vpop.f32.mrb[0].mxu0
  %v206 = vadd.f32 %v71, %v205
  %v207 = vpop.f32.mrb[0].mxu0
  %208 = vmatprep.mubr.bf16.mxu0 0
  %209 = vmatmul.mubr.bf16.gmra.mrb[0].mxu0 %v126
  %v210 = vpop.f32.mrb[0].mxu0
  %v211 = vadd.f32 %v71, %v210
  %v212 = vpop.f32.mrb[0].mxu0
  %v213 = vpop.f32.mrb[0].mxu0
  %v214 = vadd.f32 %v71, %v213
  %v215 = vpop.f32.mrb[0].mxu0
  %216 = vmatprep.mubr.bf16.mxu0 0
  %217 = vmatmul.mubr.bf16.gmra.mrb[0].mxu0 %v129
  %v218 = vpop.f32.mrb[0].mxu0
  %v219 = vadd.f32 %v71, %v218
  %v220 = vpop.f32.mrb[0].mxu0
  %v221 = vpop.f32.mrb[0].mxu0
  %v222 = vadd.f32 %v71, %v221
  %v223 = vpop.f32.mrb[0].mxu0
  %224 = vmatprep.mubr.bf16.mxu0 0
  %225 = vmatmul.mubr.bf16.gmra.mrb[0].mxu0 %v132
  %v226 = vpop.f32.mrb[0].mxu0
  %v227 = vadd.f32 %v71, %v226
  %v228 = vpop.f32.mrb[0].mxu0
  %v229 = vpop.f32.mrb[0].mxu0
  %v230 = vadd.f32 %v71, %v229
  %v231 = vpop.f32.mrb[0].mxu0
  %232 = vmatprep.mubr.bf16.mxu0 0
  %233 = vmatmul.mubr.bf16.gmra.mrb[0].mxu0 %v135
  %v234 = vpop.f32.mrb[0].mxu0
  %v235 = vadd.f32 %v71, %v234
  %v236 = vpop.f32.mrb[0].mxu0
  %v237 = vpop.f32.mrb[0].mxu0
  %v238 = vadd.f32 %v71, %v237
  %v239 = vpop.f32.mrb[0].mxu0
  %240 = vdwg.mxu0
  %vm241 = vcmp.gt.f32.partialorder %v179, 0.0
  %vm242 = vcmp.gt.f32.partialorder %v182, 0.0
  %vm243 = vcmp.gt.f32.partialorder %v187, 0.0
  %vm244 = vcmp.gt.f32.partialorder %v190, 0.0
  %vm245 = vcmp.gt.f32.partialorder %v195, 0.0
  %vm246 = vcmp.gt.f32.partialorder %v198, 0.0
  %vm247 = vcmp.gt.f32.partialorder %v203, 0.0
  %vm248 = vcmp.gt.f32.partialorder %v206, 0.0
  %vm249 = vcmp.gt.f32.partialorder %v211, 0.0
  %vm250 = vcmp.gt.f32.partialorder %v214, 0.0
  %vm251 = vcmp.gt.f32.partialorder %v219, 0.0
  %vm252 = vcmp.gt.f32.partialorder %v222, 0.0
  %vm253 = vcmp.gt.f32.partialorder %v227, 0.0
  %vm254 = vcmp.gt.f32.partialorder %v230, 0.0
  %vm255 = vcmp.gt.f32.partialorder %v235, 0.0
  %vm256 = vcmp.gt.f32.partialorder %v238, 0.0
  %v257 = vmul.f32 %v179, 0.01
  %v258 = vmul.f32 %v182, 0.01
  %v259 = vmul.f32 %v187, 0.01
  %v260 = vmul.f32 %v190, 0.01
  %v261 = vmul.f32 %v195, 0.01
  %v262 = vmul.f32 %v198, 0.01
  %v263 = vmul.f32 %v203, 0.01
  %v264 = vmul.f32 %v206, 0.01
  %v265 = vmul.f32 %v211, 0.01
  %v266 = vmul.f32 %v214, 0.01
  %v267 = vmul.f32 %v219, 0.01
  %v268 = vmul.f32 %v222, 0.01
  %v269 = vmul.f32 %v227, 0.01
  %v270 = vmul.f32 %v230, 0.01
  %v271 = vmul.f32 %v235, 0.01
  %v272 = vmul.f32 %v238, 0.01
  %v273 = vsel %vm241, %v179, %v257
  %v274 = vsel %vm242, %v182, %v258
  %v275 = vsel %vm243, %v187, %v259
  %v276 = vsel %vm244, %v190, %v260
  %v277 = vsel %vm245, %v195, %v261
  %v278 = vsel %vm246, %v198, %v262
  %v279 = vsel %vm247, %v203, %v263
  %v280 = vsel %vm248, %v206, %v264
  %v281 = vsel %vm249, %v211, %v265
  %v282 = vsel %vm250, %v214, %v266
  %v283 = vsel %vm251, %v219, %v267
  %v284 = vsel %vm252, %v222, %v268
  %v285 = vsel %vm253, %v227, %v269
  %v286 = vsel %vm254, %v230, %v270
  %v287 = vsel %vm255, %v235, %v271
  %v288 = vsel %vm256, %v238, %v272
  %v289 = vpack.c.bf16 %v274, %v273
  %v290 = vpack.c.bf16 %v276, %v275
  %v291 = vpack.c.bf16 %v278, %v277
  %v292 = vpack.c.bf16 %v280, %v279
  %v293 = vpack.c.bf16 %v282, %v281
  %v294 = vpack.c.bf16 %v284, %v283
  %v295 = vpack.c.bf16 %v286, %v285
  %v296 = vpack.c.bf16 %v288, %v287
  %v297 = vld [vmem:[%s3] sm:$0xf]
  %v298 = vld [vmem:[%s3 + $0x4] sm:$0xf]
  %v299 = vld [vmem:[%s3 + $0x8] sm:$0xf]
  %v300 = vld [vmem:[%s3 + $0xc] sm:$0xf]
  %v301 = vld [vmem:[%s3 + $0x10] sm:$0xf]
  %v302 = vld [vmem:[%s3 + $0x14] sm:$0xf]
  %v303 = vld [vmem:[%s3 + $0x18] sm:$0xf]
  %v304 = vld [vmem:[%s3 + $0x1c] sm:$0xf]
  %v305 = vld [vmem:[%s3 + $0x20] sm:$0xf]
  %v306 = vld [vmem:[%s3 + $0x24] sm:$0xf]
  %v307 = vld [vmem:[%s3 + $0x28] sm:$0xf]
  %v308 = vld [vmem:[%s3 + $0x2c] sm:$0xf]
  %v309 = vld [vmem:[%s3 + $0x30] sm:$0xf]
  %v310 = vld [vmem:[%s3 + $0x34] sm:$0xf]
  %v311 = vld [vmem:[%s3 + $0x38] sm:$0xf]
  %v312 = vld [vmem:[%s3 + $0x3c] sm:$0xf]
  %v313 = vld [vmem:[%s4] sm:$0x1]
  %v315 = vlaneseq
  %v316 = vshrl.u32 %v315, 7
  %v317 = vsub.s32 0, %v316
  %v318 = vrot.slane %v313, %v317
  %v336 = vunpack.c.l.b16 %v297
  %v337 = vunpack.c.l.b16 %v298
  %v338 = vunpack.c.l.b16 %v299
  %v339 = vunpack.c.l.b16 %v300
  %v340 = vunpack.c.l.b16 %v301
  %v341 = vunpack.c.l.b16 %v302
  %v342 = vunpack.c.l.b16 %v303
  %v343 = vunpack.c.l.b16 %v304
  %v344 = vunpack.c.l.b16 %v305
  %v345 = vunpack.c.l.b16 %v306
  %v346 = vunpack.c.l.b16 %v307
  %v347 = vunpack.c.l.b16 %v308
  %v348 = vunpack.c.l.b16 %v309
  %v349 = vunpack.c.l.b16 %v310
  %v350 = vunpack.c.l.b16 %v311
  %v351 = vunpack.c.l.b16 %v312
  %v352 = vpack.c.b16 %v337, %v336
  %v353 = vpack.c.b16 %v339, %v338
  %v354 = vpack.c.b16 %v341, %v340
  %v355 = vpack.c.b16 %v343, %v342
  %v356 = vpack.c.b16 %v345, %v344
  %v357 = vpack.c.b16 %v347, %v346
  %v358 = vpack.c.b16 %v349, %v348
  %v359 = vpack.c.b16 %v351, %v350
  %368 = vmatprep.subr.bf16.mxu0 0
  %369 = vmatpush1.bf16.msra.mxu0 %v352
  %370 = vmatprep.subr.bf16.mxu0 0
  %371 = vmatpush1.bf16.msra.mxu0 %v353
  %372 = vmatprep.subr.bf16.mxu0 0
  %373 = vmatpush1.bf16.msra.mxu0 %v354
  %374 = vmatprep.subr.bf16.mxu0 0
  %375 = vmatpush1.bf16.msra.mxu0 %v355
  %376 = vmatprep.subr.bf16.mxu0 0
  %377 = vmatpush1.bf16.msra.mxu0 %v356
  %378 = vmatprep.subr.bf16.mxu0 0
  %379 = vmatpush1.bf16.msra.mxu0 %v357
  %380 = vmatprep.subr.bf16.mxu0 0
  %381 = vmatpush1.bf16.msra.mxu0 %v358
  %382 = vmatprep.subr.bf16.mxu0 0
  %383 = vmatpush1.bf16.msra.mxu0 %v359
  %384 = vmatprep.subr.bf16.mxu0 0
  %385 = vmatpush1.bf16.msra.mxu0 0
  %386 = vmatprep.subr.bf16.mxu0 0
  %387 = vmatpush1.bf16.msra.mxu0 0
  %388 = vmatprep.subr.bf16.mxu0 0
  %389 = vmatpush1.bf16.msra.mxu0 0
  %390 = vmatprep.subr.bf16.mxu0 0
  %391 = vmatpush1.bf16.msra.mxu0 0
  %392 = vmatprep.subr.bf16.mxu0 0
  %393 = vmatpush1.bf16.msra.mxu0 0
  %394 = vmatprep.subr.bf16.mxu0 0
  %395 = vmatpush1.bf16.msra.mxu0 0
  %396 = vmatprep.subr.bf16.mxu0 0
  %397 = vmatpush1.bf16.msra.mxu0 0
  %398 = vmatprep.subr.bf16.mxu0 0
  %399 = vmatpush1.bf16.msra.mxu0 0
  %400 = vmatprep.mubr.bf16.mxu0 0
  %401 = vmatmul.mubr.bf16.gmra.mrb[0].mxu0 %v289
  %v402 = vpop.f32.mrb[0].mxu0
  %v403 = vadd.f32 %v318, %v402
  %v404 = vpop.f32.mrb[0].mxu0
  %v405 = vpop.f32.mrb[0].mxu0
  %v406 = vadd.f32 %v318, %v405
  %v407 = vpop.f32.mrb[0].mxu0
  %408 = vmatprep.mubr.bf16.mxu0 0
  %409 = vmatmul.mubr.bf16.gmra.mrb[0].mxu0 %v290
  %v410 = vpop.f32.mrb[0].mxu0
  %v411 = vadd.f32 %v318, %v410
  %v412 = vpop.f32.mrb[0].mxu0
  %v413 = vpop.f32.mrb[0].mxu0
  %v414 = vadd.f32 %v318, %v413
  %v415 = vpop.f32.mrb[0].mxu0
  %416 = vmatprep.mubr.bf16.mxu0 0
  %417 = vmatmul.mubr.bf16.gmra.mrb[0].mxu0 %v291
  %v418 = vpop.f32.mrb[0].mxu0
  %v419 = vadd.f32 %v318, %v418
  %v420 = vpop.f32.mrb[0].mxu0
  %v421 = vpop.f32.mrb[0].mxu0
  %v422 = vadd.f32 %v318, %v421
  %v423 = vpop.f32.mrb[0].mxu0
  %424 = vmatprep.mubr.bf16.mxu0 0
  %425 = vmatmul.mubr.bf16.gmra.mrb[0].mxu0 %v292
  %v426 = vpop.f32.mrb[0].mxu0
  %v427 = vadd.f32 %v318, %v426
  %v428 = vpop.f32.mrb[0].mxu0
  %v429 = vpop.f32.mrb[0].mxu0
  %v430 = vadd.f32 %v318, %v429
  %v431 = vpop.f32.mrb[0].mxu0
  %432 = vmatprep.mubr.bf16.mxu0 0
  %433 = vmatmul.mubr.bf16.gmra.mrb[0].mxu0 %v293
  %v434 = vpop.f32.mrb[0].mxu0
  %v435 = vadd.f32 %v318, %v434
  %v436 = vpop.f32.mrb[0].mxu0
  %v437 = vpop.f32.mrb[0].mxu0
  %v438 = vadd.f32 %v318, %v437
  %v439 = vpop.f32.mrb[0].mxu0
  %440 = vmatprep.mubr.bf16.mxu0 0
  %441 = vmatmul.mubr.bf16.gmra.mrb[0].mxu0 %v294
  %v442 = vpop.f32.mrb[0].mxu0
  %v443 = vadd.f32 %v318, %v442
  %v444 = vpop.f32.mrb[0].mxu0
  %v445 = vpop.f32.mrb[0].mxu0
  %v446 = vadd.f32 %v318, %v445
  %v447 = vpop.f32.mrb[0].mxu0
  %448 = vmatprep.mubr.bf16.mxu0 0
  %449 = vmatmul.mubr.bf16.gmra.mrb[0].mxu0 %v295
  %v450 = vpop.f32.mrb[0].mxu0
  %v451 = vadd.f32 %v318, %v450
  %v452 = vpop.f32.mrb[0].mxu0
  %v453 = vpop.f32.mrb[0].mxu0
  %v454 = vadd.f32 %v318, %v453
  %v455 = vpop.f32.mrb[0].mxu0
  %456 = vmatprep.mubr.bf16.mxu0 0
  %457 = vmatmul.mubr.bf16.gmra.mrb[0].mxu0 %v296
  %v458 = vpop.f32.mrb[0].mxu0
  %v459 = vadd.f32 %v318, %v458
  %v460 = vpop.f32.mrb[0].mxu0
  %v461 = vpop.f32.mrb[0].mxu0
  %v462 = vadd.f32 %v318, %v461
  %v463 = vpop.f32.mrb[0].mxu0
  %464 = vdwg.mxu0
  %vm465 = vcmp.gt.f32.partialorder %v403, 0.0
  %vm466 = vcmp.gt.f32.partialorder %v406, 0.0
  %vm467 = vcmp.gt.f32.partialorder %v411, 0.0
  %vm468 = vcmp.gt.f32.partialorder %v414, 0.0
  %vm469 = vcmp.gt.f32.partialorder %v419, 0.0
  %vm470 = vcmp.gt.f32.partialorder %v422, 0.0
  %vm471 = vcmp.gt.f32.partialorder %v427, 0.0
  %vm472 = vcmp.gt.f32.partialorder %v430, 0.0
  %vm473 = vcmp.gt.f32.partialorder %v435, 0.0
  %vm474 = vcmp.gt.f32.partialorder %v438, 0.0
  %vm475 = vcmp.gt.f32.partialorder %v443, 0.0
  %vm476 = vcmp.gt.f32.partialorder %v446, 0.0
  %vm477 = vcmp.gt.f32.partialorder %v451, 0.0
  %vm478 = vcmp.gt.f32.partialorder %v454, 0.0
  %vm479 = vcmp.gt.f32.partialorder %v459, 0.0
  %vm480 = vcmp.gt.f32.partialorder %v462, 0.0
  %v481 = vmul.f32 %v403, 0.01
  %v482 = vmul.f32 %v406, 0.01
  %v483 = vmul.f32 %v411, 0.01
  %v484 = vmul.f32 %v414, 0.01
  %v485 = vmul.f32 %v419, 0.01
  %v486 = vmul.f32 %v422, 0.01
  %v487 = vmul.f32 %v427, 0.01
  %v488 = vmul.f32 %v430, 0.01
  %v489 = vmul.f32 %v435, 0.01
  %v490 = vmul.f32 %v438, 0.01
  %v491 = vmul.f32 %v443, 0.01
  %v492 = vmul.f32 %v446, 0.01
  %v493 = vmul.f32 %v451, 0.01
  %v494 = vmul.f32 %v454, 0.01
  %v495 = vmul.f32 %v459, 0.01
  %v496 = vmul.f32 %v462, 0.01
  %v497 = vsel %vm465, %v403, %v481
  %v498 = vsel %vm466, %v406, %v482
  %v499 = vsel %vm467, %v411, %v483
  %v500 = vsel %vm468, %v414, %v484
  %v501 = vsel %vm469, %v419, %v485
  %v502 = vsel %vm470, %v422, %v486
  %v503 = vsel %vm471, %v427, %v487
  %v504 = vsel %vm472, %v430, %v488
  %v505 = vsel %vm473, %v435, %v489
  %v506 = vsel %vm474, %v438, %v490
  %v507 = vsel %vm475, %v443, %v491
  %v508 = vsel %vm476, %v446, %v492
  %v509 = vsel %vm477, %v451, %v493
  %v510 = vsel %vm478, %v454, %v494
  %v511 = vsel %vm479, %v459, %v495
  %v512 = vsel %vm480, %v462, %v496
  %v513 = vpack.c.bf16 %v498, %v497
  %v514 = vpack.c.bf16 %v500, %v499
  %v515 = vpack.c.bf16 %v502, %v501
  %v516 = vpack.c.bf16 %v504, %v503
  %v517 = vpack.c.bf16 %v506, %v505
  %v518 = vpack.c.bf16 %v508, %v507
  %v519 = vpack.c.bf16 %v510, %v509
  %v520 = vpack.c.bf16 %v512, %v511
  %v521 = vld [vmem:[%s5] sm:$0xf]
  %v522 = vld [vmem:[%s5 + $0x4] sm:$0xf]
  %v523 = vld [vmem:[%s5 + $0x8] sm:$0xf]
  %v524 = vld [vmem:[%s5 + $0xc] sm:$0xf]
  %v525 = vld [vmem:[#allocation2] sm:$0x1]
  %v527 = vlaneseq
  %v528 = vshrl.u32 %v527, 7
  %v529 = vsub.s32 0, %v528
  %v530 = vrot.slane %v525, %v529
  %v536 = vunpack.c.l.b16 %v521
  %v537 = vunpack.c.l.b16 %v522
  %v538 = vunpack.c.l.b16 %v523
  %v539 = vunpack.c.l.b16 %v524
  %v540 = vpack.c.b16 %v537, %v536
  %v541 = vpack.c.b16 %v539, %v538
  %vm544 = vcmask 261120
  %v546 = vsel %vm544, %v513, 0
  %v549 = vsel %vm544, %v514, 0
  %v552 = vsel %vm544, %v515, 0
  %v555 = vsel %vm544, %v516, 0
  %v558 = vsel %vm544, %v517, 0
  %v561 = vsel %vm544, %v518, 0
  %v564 = vsel %vm544, %v519, 0
  %v567 = vsel %vm544, %v520, 0
  %569 = vmatprep.subr.bf16.mxu0 0
  %570 = vmatpush1.bf16.msra.mxu0 %v540
  %571 = vmatprep.subr.bf16.mxu0 0
  %572 = vmatpush1.bf16.msra.mxu0 %v541
  %573 = vmatprep.subr.bf16.mxu0 0
  %574 = vmatpush1.bf16.msra.mxu0 0
  %575 = vmatprep.subr.bf16.mxu0 0
  %576 = vmatpush1.bf16.msra.mxu0 0
  %577 = vmatprep.subr.bf16.mxu0 0
  %578 = vmatpush1.bf16.msra.mxu0 0
  %579 = vmatprep.subr.bf16.mxu0 0
  %580 = vmatpush1.bf16.msra.mxu0 0
  %581 = vmatprep.subr.bf16.mxu0 0
  %582 = vmatpush1.bf16.msra.mxu0 0
  %583 = vmatprep.subr.bf16.mxu0 0
  %584 = vmatpush1.bf16.msra.mxu0 0
  %585 = vmatprep.subr.bf16.mxu0 0
  %586 = vmatpush1.bf16.msra.mxu0 0
  %587 = vmatprep.subr.bf16.mxu0 0
  %588 = vmatpush1.bf16.msra.mxu0 0
  %589 = vmatprep.subr.bf16.mxu0 0
  %590 = vmatpush1.bf16.msra.mxu0 0
  %591 = vmatprep.subr.bf16.mxu0 0
  %592 = vmatpush1.bf16.msra.mxu0 0
  %593 = vmatprep.subr.bf16.mxu0 0
  %594 = vmatpush1.bf16.msra.mxu0 0
  %595 = vmatprep.subr.bf16.mxu0 0
  %596 = vmatpush1.bf16.msra.mxu0 0
  %597 = vmatprep.subr.bf16.mxu0 0
  %598 = vmatpush1.bf16.msra.mxu0 0
  %599 = vmatprep.subr.bf16.mxu0 0
  %600 = vmatpush1.bf16.msra.mxu0 0
  %601 = vmatprep.mubr.bf16.mxu0 0
  %602 = vmatmul.mubr.bf16.gmra.mrb[0].mxu0 %v546
  %v603 = vpop.f32.mrb[0].mxu0
  %v604 = vadd.f32 %v530, %v603
  %v605 = vpop.f32.mrb[0].mxu0
  %v606 = vpop.f32.mrb[0].mxu0
  %v607 = vadd.f32 %v530, %v606
  %v608 = vpop.f32.mrb[0].mxu0
  %609 = vmatprep.mubr.bf16.mxu0 0
  %610 = vmatmul.mubr.bf16.gmra.mrb[0].mxu0 %v549
  %v611 = vpop.f32.mrb[0].mxu0
  %v612 = vadd.f32 %v530, %v611
  %v613 = vpop.f32.mrb[0].mxu0
  %v614 = vpop.f32.mrb[0].mxu0
  %v615 = vadd.f32 %v530, %v614
  %v616 = vpop.f32.mrb[0].mxu0
  %617 = vmatprep.mubr.bf16.mxu0 0
  %618 = vmatmul.mubr.bf16.gmra.mrb[0].mxu0 %v552
  %v619 = vpop.f32.mrb[0].mxu0
  %v620 = vadd.f32 %v530, %v619
  %v621 = vpop.f32.mrb[0].mxu0
  %v622 = vpop.f32.mrb[0].mxu0
  %v623 = vadd.f32 %v530, %v622
  %v624 = vpop.f32.mrb[0].mxu0
  %625 = vmatprep.mubr.bf16.mxu0 0
  %626 = vmatmul.mubr.bf16.gmra.mrb[0].mxu0 %v555
  %v627 = vpop.f32.mrb[0].mxu0
  %v628 = vadd.f32 %v530, %v627
  %v629 = vpop.f32.mrb[0].mxu0
  %v630 = vpop.f32.mrb[0].mxu0
  %v631 = vadd.f32 %v530, %v630
  %v632 = vpop.f32.mrb[0].mxu0
  %633 = vmatprep.mubr.bf16.mxu0 0
  %634 = vmatmul.mubr.bf16.gmra.mrb[0].mxu0 %v558
  %v635 = vpop.f32.mrb[0].mxu0
  %v636 = vadd.f32 %v530, %v635
  %v637 = vpop.f32.mrb[0].mxu0
  %v638 = vpop.f32.mrb[0].mxu0
  %v639 = vadd.f32 %v530, %v638
  %v640 = vpop.f32.mrb[0].mxu0
  %641 = vmatprep.mubr.bf16.mxu0 0
  %642 = vmatmul.mubr.bf16.gmra.mrb[0].mxu0 %v561
  %v643 = vpop.f32.mrb[0].mxu0
  %v644 = vadd.f32 %v530, %v643
  %v645 = vpop.f32.mrb[0].mxu0
  %v646 = vpop.f32.mrb[0].mxu0
  %v647 = vadd.f32 %v530, %v646
  %v648 = vpop.f32.mrb[0].mxu0
  %649 = vmatprep.mubr.bf16.mxu0 0
  %650 = vmatmul.mubr.bf16.gmra.mrb[0].mxu0 %v564
  %v651 = vpop.f32.mrb[0].mxu0
  %v652 = vadd.f32 %v530, %v651
  %v653 = vpop.f32.mrb[0].mxu0
  %v654 = vpop.f32.mrb[0].mxu0
  %v655 = vadd.f32 %v530, %v654
  %v656 = vpop.f32.mrb[0].mxu0
  %657 = vmatprep.mubr.bf16.mxu0 0
  %658 = vmatmul.mubr.bf16.gmra.mrb[0].mxu0 %v567
  %v659 = vpop.f32.mrb[0].mxu0
  %v660 = vadd.f32 %v530, %v659
  %v661 = vpop.f32.mrb[0].mxu0
  %v662 = vpop.f32.mrb[0].mxu0
  %v663 = vadd.f32 %v530, %v662
  %v664 = vpop.f32.mrb[0].mxu0
  %665 = vdwg.mxu0
  %vm666 = vcmask 7168
  %667 = vst.msk [vmem:[%s7] sm:$0xff] %vm666, %v604
  %668 = vst.msk [vmem:[%s7 + $0x8] sm:$0xff] %vm666, %v607
  %669 = vst.msk [vmem:[%s7 + $0x10] sm:$0xff] %vm666, %v612
  %670 = vst.msk [vmem:[%s7 + $0x18] sm:$0xff] %vm666, %v615
  %671 = vst.msk [vmem:[%s7 + $0x20] sm:$0xff] %vm666, %v620
  %672 = vst.msk [vmem:[%s7 + $0x28] sm:$0xff] %vm666, %v623
  %673 = vst.msk [vmem:[%s7 + $0x30] sm:$0xff] %vm666, %v628
  %674 = vst.msk [vmem:[%s7 + $0x38] sm:$0xff] %vm666, %v631
  %675 = vst.msk [vmem:[%s7 + $0x40] sm:$0xff] %vm666, %v636
  %676 = vst.msk [vmem:[%s7 + $0x48] sm:$0xff] %vm666, %v639
  %677 = vst.msk [vmem:[%s7 + $0x50] sm:$0xff] %vm666, %v644
  %678 = vst.msk [vmem:[%s7 + $0x58] sm:$0xff] %vm666, %v647
  %679 = vst.msk [vmem:[%s7 + $0x60] sm:$0xff] %vm666, %v652
  %680 = vst.msk [vmem:[%s7 + $0x68] sm:$0xff] %vm666, %v655
  %681 = vst.msk [vmem:[%s7 + $0x70] sm:$0xff] %vm666, %v660
  %682 = vst.msk [vmem:[%s7 + $0x78] sm:$0xff] %vm666, %v663
  // Predicated region
  $region30: #{regression_network_forward.1} parent=0 // pred_check
    _
  $region31: #{regression_network_forward.1} parent=0 // pred_check_branch
    %684 = sbr.rel (0) target = $region33
  $region32: #{regression_network_forward.1} parent=0 // pred_region
    _
  $region33: #{regression_network_forward.1} parent=0 // pred_fallthru
    _
  // Predicated region
  $region34: #{regression_network_forward.1} parent=0 // pred_check
    _
  $region35: #{regression_network_forward.1} parent=0 // pred_check_branch
    %686 = sbr.rel (0) target = $region37
  $region36: #{regression_network_forward.1} parent=0 // pred_region
    _
  $region37: #{regression_network_forward.1} parent=0 // pred_fallthru
    _

</llo_original>
